<compile_context>
chip_gen: v7x
topology: tpu7x:2x2x1
jax: 0.10.0
libtpu: 0.0.40
codegen_flags: <defaults>
</compile_context>

<pallas_src>
import functools

import jax
import jax.numpy as jnp
from jax import lax
from jax.experimental import pallas as pl
from jax.experimental.pallas import tpu as pltpu

_LANE = 128   # lane width
_SUB = 16     # sublane granularity (safe for f32 and bf16 blocks)
_PARTS = 2    # leading 'parallel' grid axis -> split across the 2 TCs on v7x


def _floss_kernel(w_ref, x_ref, y_ref, num_ref, acc, *, alpha, gamma):
    # w_ref: (3,) f32 in SMEM      x_ref/y_ref: (3, tile_r, 128) native dtype (VMEM)
    # num_ref: (1, 1, 1) f32 partial numerator per part
    # acc: (tile_r, 128) f32 VMEM accumulator, persistent across the reduction axis
    k = pl.program_id(1)

    @pl.when(k == 0)
    def _init():
        acc[...] = jnp.zeros_like(acc)

    # Unrolled over the 3 classes; each operand is a lane-dense (tile_r, 128) slab.
    x0 = x_ref[0].astype(jnp.float32)
    x1 = x_ref[1].astype(jnp.float32)
    x2 = x_ref[2].astype(jnp.float32)

    xmax = jnp.maximum(jnp.maximum(x0, x1), x2)
    e0 = jnp.exp(x0 - xmax)
    e1 = jnp.exp(x1 - xmax)
    e2 = jnp.exp(x2 - xmax)
    lse = jnp.log(e0 + e1 + e2) + xmax              # logsumexp per position

    # Weighted soft-target cross entropy: ce = sum_c w_c * y_c * (lse - x_c)  (= -w*y*logp).
    # The mask was pre-folded into y (y==0 at masked-out / padded positions => ce==0 there).
    ce = (w_ref[0] * y_ref[0].astype(jnp.float32) * (lse - x0)
          + w_ref[1] * y_ref[1].astype(jnp.float32) * (lse - x1)
          + w_ref[2] * y_ref[2].astype(jnp.float32) * (lse - x2))

    pt = jnp.exp(-ce)
    one_minus_pt = 1.0 - pt                          # ce >= 0 -> pt <= 1 -> this is >= 0
    if isinstance(gamma, int):
        focal_w = lax.integer_pow(one_minus_pt, gamma)        # gamma==2 -> one VPU multiply
    else:
        focal_w = jnp.maximum(one_minus_pt, 0.0) ** gamma      # guard tiny negatives
    acc[...] += focal_w * ce                          # masked/padded positions add exactly 0

    @pl.when(k == pl.num_programs(1) - 1)
    def _finalize():
        num_ref[...] = jnp.reshape(alpha * jnp.sum(acc[...]), (1, 1, 1))


def floss(input_btc, target_btc, mask_bt, weight, alpha=1.0, gamma=2, tile_rows=1024):
    """FLoss forward.  input/target: (B, T, 3), mask: (B, T) bool, weight: (3,)."""
    B, T, C = input_btc.shape
    assert C == 3, "kernel is specialized for the module's 3 classes"
    N = B * T

    tile_rows = -(-tile_rows // _SUB) * _SUB
    rows = -(-N // _LANE)                               # 128-wide lane rows needed
    rows_per_part = -(-rows // _PARTS)
    tile_r = max(_SUB, min(tile_rows, -(-rows_per_part // _SUB) * _SUB))
    k_tiles = max(1, -(-rows_per_part // tile_r))
    rows_pad = _PARTS * k_tiles * tile_r
    n_pad = rows_pad * _LANE

    def to_c_rows_lane(a):
        a2 = jnp.transpose(a.reshape(N, C))             # (3, N): positions lane-dense
        a2 = jnp.pad(a2, ((0, 0), (0, n_pad - N)))      # zero pad (contributes 0 below)
        return a2.reshape(C, rows_pad, _LANE)

    # Fold the boolean mask into the soft targets (exact: multiply by 0/1).  Fuses into the
    # transpose/pad producer XLA already emits for y, and removes the mask stream from the
    # kernel entirely.
    y_masked = target_btc * mask_bt[..., None].astype(target_btc.dtype)

    x = to_c_rows_lane(input_btc)                        # keep native dtype (no f32 upcast)
    y = to_c_rows_lane(y_masked)
    w = jnp.asarray(weight, jnp.float32).reshape(C)
    den = jnp.sum(mask_bt, dtype=jnp.int32).astype(jnp.float32)   # exact valid-position count

    kernel = functools.partial(_floss_kernel, alpha=float(alpha), gamma=gamma)

    # VMEM per step (f32, tile_r=1024): 2 inputs * 3 classes * 512 KiB * 2 buffers
    # + 1 accumulator (512 KiB) ~= 6.6 MiB -> fits default scoped VMEM on v5e/v6e/v7x.
    num_out = pl.pallas_call(
        kernel,
        out_shape=jax.ShapeDtypeStruct((_PARTS, 1, 1), jnp.float32),
        grid_spec=pltpu.PrefetchScalarGridSpec(
            num_scalar_prefetch=0,
            grid=(_PARTS, k_tiles),
            in_specs=[
                pl.BlockSpec(memory_space=pltpu.MemorySpace.SMEM),          # weight (3,)
                pl.BlockSpec((C, tile_r, _LANE),
                             lambda p, k: (0, p * k_tiles + k, 0)),         # logits
                pl.BlockSpec((C, tile_r, _LANE),
                             lambda p, k: (0, p * k_tiles + k, 0)),         # masked soft targets
            ],
            out_specs=pl.BlockSpec((1, 1, 1), lambda p, k: (p, 0, 0)),      # num partial
            scratch_shapes=[pltpu.VMEM((tile_r, _LANE), jnp.float32)],
        ),
        compiler_params=pltpu.CompilerParams(
            dimension_semantics=("parallel", "arbitrary")),
    )(w, x, y)

    return jnp.sum(num_out) / den


def _floss_ref(input_btc, target_btc, mask_bt, weight, alpha=1.0, gamma=2):
    # Pure-JAX reference mirroring the PyTorch module, for correctness check.
    x = input_btc.astype(jnp.float32)
    y = target_btc.astype(jnp.float32)
    w = jnp.asarray(weight, jnp.float32)
    logp = jax.nn.log_softmax(x, axis=-1)
    ce = -jnp.sum(w[None, None, :] * y * logp, axis=-1)          # (B, T)
    pt = jnp.exp(-ce)
    focal = alpha * (1.0 - pt) ** gamma * ce
    m = mask_bt.astype(jnp.float32)
    return jnp.sum(focal * m) / jnp.sum(m)


if __name__ == "__main__":
    key = jax.random.PRNGKey(0)
    k1, k2, k3 = jax.random.split(key, 3)

    # Small shapes consistent with the module (3 classes, soft targets, boolean mask).
    B, T, C = 2, 16, 3
    logits = jax.random.normal(k1, (B, T, C), jnp.float32)
    target = jax.nn.softmax(jax.random.normal(k2, (B, T, C), jnp.float32), axis=-1)
    mask = (jax.random.uniform(k3, (B, T)) > 0.4)
    mask = mask.at[0, 0].set(True)            # guarantee at least one valid position
    weight = jnp.array([1.0, 1.0, 1.0], jnp.float32)

    out = jax.block_until_ready(floss(logits, target, mask, weight, alpha=1.0, gamma=2))
    ref = _floss_ref(logits, target, mask, weight, alpha=1.0, gamma=2)
    assert jnp.allclose(out, ref, rtol=1e-5, atol=1e-5), (out, ref)

    # Second check: exercises the multi-step accumulator path (k_tiles > 1 per part).
    k4, k5, k6 = jax.random.split(jax.random.PRNGKey(1), 3)
    B2, T2 = 2, 4096
    logits2 = jax.random.normal(k4, (B2, T2, C), jnp.float32)
    target2 = jax.nn.softmax(jax.random.normal(k5, (B2, T2, C), jnp.float32), axis=-1)
    mask2 = jax.random.uniform(k6, (B2, T2)) > 0.3
    weight2 = jnp.array([0.5, 1.0, 2.0], jnp.float32)
    out2 = jax.block_until_ready(
        floss(logits2, target2, mask2, weight2, alpha=0.25, gamma=2, tile_rows=16))
    ref2 = _floss_ref(logits2, target2, mask2, weight2, alpha=0.25, gamma=2)
    assert jnp.allclose(out2, ref2, rtol=1e-4, atol=1e-5), (out2, ref2)

    print("KERNEL_OK")
</pallas_src>

<mosaic_0001>
module attributes {stable_mosaic.version = 11 : i64} {
  func.func @_floss_kernel(%arg0: i32, %arg1: i32, %arg2: memref<3xf32, #tpu.memory_space<smem>>, %arg3: memref<3x16x128xf32, #tpu.memory_space<vmem>>, %arg4: memref<3x16x128xf32, #tpu.memory_space<vmem>>, %arg5: memref<1x1x1xf32, #tpu.memory_space<vmem>>, %arg6: memref<16x128xf32, #tpu.memory_space<vmem>>) attributes {dimension_semantics = [#tpu.dimension_semantics<parallel>, #tpu.dimension_semantics<arbitrary>], iteration_bounds = array<i64: 2, 1>, scalar_prefetch = 0 : i64, scratch_operands = 1 : i64, tpu.core_type = #tpu.core_type<tc>, window_params = [{transform_indices = @transform_0, window_bounds = array<i64: 3>}, {transform_indices = @transform_1, window_bounds = array<i64: 3, 16, 128>}, {transform_indices = @transform_2, window_bounds = array<i64: 3, 16, 128>}, {transform_indices = @transform_3, window_bounds = array<i64: 1, 1, 1>}]} {
    %c0_i32 = arith.constant 0 : i32
    %0 = arith.cmpi eq, %arg1, %c0_i32 : i32
    %1 = arith.extui %0 : i1 to i32
    %c0_i32_0 = arith.constant 0 : i32
    %2 = arith.cmpi ne, %1, %c0_i32_0 : i32
    scf.if %2 {
      %cst_26 = arith.constant 0.000000e+00 : f32
      %57 = vector.broadcast %cst_26 : f32 to vector<16x128xf32>
      %c0_27 = arith.constant 0 : index
      %c0_28 = arith.constant 0 : index
      %58 = vector.load %arg6[%c0_27, %c0_28] : memref<16x128xf32, #tpu.memory_space<vmem>>, vector<16x128xf32>
      tpu.vector_store %arg6[%c0_27, %c0_28], %57 {strides = array<i32>} : memref<16x128xf32, #tpu.memory_space<vmem>>, vector<16x128xf32>,
    } else {
    }
    %c0 = arith.constant 0 : index
    %c0_1 = arith.constant 0 : index
    %c0_2 = arith.constant 0 : index
    %3 = vector.load %arg3[%c0, %c0_1, %c0_2] : memref<3x16x128xf32, #tpu.memory_space<vmem>>, vector<1x16x128xf32>
    %4 = vector.shape_cast %3 : vector<1x16x128xf32> to vector<16x128xf32>
    %c1 = arith.constant 1 : index
    %c0_3 = arith.constant 0 : index
    %c0_4 = arith.constant 0 : index
    %5 = vector.load %arg3[%c1, %c0_3, %c0_4] : memref<3x16x128xf32, #tpu.memory_space<vmem>>, vector<1x16x128xf32>
    %6 = vector.shape_cast %5 : vector<1x16x128xf32> to vector<16x128xf32>
    %c2 = arith.constant 2 : index
    %c0_5 = arith.constant 0 : index
    %c0_6 = arith.constant 0 : index
    %7 = vector.load %arg3[%c2, %c0_5, %c0_6] : memref<3x16x128xf32, #tpu.memory_space<vmem>>, vector<1x16x128xf32>
    %8 = vector.shape_cast %7 : vector<1x16x128xf32> to vector<16x128xf32>
    %9 = arith.maximumf %4, %6 : vector<16x128xf32>
    %10 = arith.maximumf %9, %8 : vector<16x128xf32>
    %11 = arith.subf %4, %10 : vector<16x128xf32>
    %12 = math.exp %11 : vector<16x128xf32>
    %13 = arith.subf %6, %10 : vector<16x128xf32>
    %14 = math.exp %13 : vector<16x128xf32>
    %15 = arith.subf %8, %10 : vector<16x128xf32>
    %16 = math.exp %15 : vector<16x128xf32>
    %17 = arith.addf %12, %14 : vector<16x128xf32>
    %18 = arith.addf %17, %16 : vector<16x128xf32>
    %19 = math.log %18 : vector<16x128xf32>
    %20 = arith.addf %19, %10 : vector<16x128xf32>
    %c0_7 = arith.constant 0 : index
    %21 = memref.load %arg2[%c0_7] : memref<3xf32, #tpu.memory_space<smem>>
    %c0_8 = arith.constant 0 : index
    %c0_9 = arith.constant 0 : index
    %c0_10 = arith.constant 0 : index
    %22 = vector.load %arg4[%c0_8, %c0_9, %c0_10] : memref<3x16x128xf32, #tpu.memory_space<vmem>>, vector<1x16x128xf32>
    %23 = vector.shape_cast %22 : vector<1x16x128xf32> to vector<16x128xf32>
    %24 = vector.broadcast %21 : f32 to vector<16x128xf32>
    %25 = arith.mulf %24, %23 : vector<16x128xf32>
    %26 = arith.subf %20, %4 : vector<16x128xf32>
    %27 = arith.mulf %25, %26 : vector<16x128xf32>
    %c1_11 = arith.constant 1 : index
    %28 = memref.load %arg2[%c1_11] : memref<3xf32, #tpu.memory_space<smem>>
    %c1_12 = arith.constant 1 : index
    %c0_13 = arith.constant 0 : index
    %c0_14 = arith.constant 0 : index
    %29 = vector.load %arg4[%c1_12, %c0_13, %c0_14] : memref<3x16x128xf32, #tpu.memory_space<vmem>>, vector<1x16x128xf32>
    %30 = vector.shape_cast %29 : vector<1x16x128xf32> to vector<16x128xf32>
    %31 = vector.broadcast %28 : f32 to vector<16x128xf32>
    %32 = arith.mulf %31, %30 : vector<16x128xf32>
    %33 = arith.subf %20, %6 : vector<16x128xf32>
    %34 = arith.mulf %32, %33 : vector<16x128xf32>
    %35 = arith.addf %27, %34 : vector<16x128xf32>
    %c2_15 = arith.constant 2 : index
    %36 = memref.load %arg2[%c2_15] : memref<3xf32, #tpu.memory_space<smem>>
    %c2_16 = arith.constant 2 : index
    %c0_17 = arith.constant 0 : index
    %c0_18 = arith.constant 0 : index
    %37 = vector.load %arg4[%c2_16, %c0_17, %c0_18] : memref<3x16x128xf32, #tpu.memory_space<vmem>>, vector<1x16x128xf32>
    %38 = vector.shape_cast %37 : vector<1x16x128xf32> to vector<16x128xf32>
    %39 = vector.broadcast %36 : f32 to vector<16x128xf32>
    %40 = arith.mulf %39, %38 : vector<16x128xf32>
    %41 = arith.subf %20, %8 : vector<16x128xf32>
    %42 = arith.mulf %40, %41 : vector<16x128xf32>
    %43 = arith.addf %35, %42 : vector<16x128xf32>
    %cst = arith.constant 0.000000e+00 : f32
    %44 = vector.broadcast %cst : f32 to vector<16x128xf32>
    %45 = arith.subf %44, %43 : vector<16x128xf32>
    %46 = math.exp %45 : vector<16x128xf32>
    %cst_19 = arith.constant 1.000000e+00 : f32
    %47 = vector.broadcast %cst_19 : f32 to vector<16x128xf32>
    %48 = arith.subf %47, %46 : vector<16x128xf32>
    %49 = arith.mulf %48, %48 : vector<16x128xf32>
    %c0_20 = arith.constant 0 : index
    %c0_21 = arith.constant 0 : index
    %50 = vector.load %arg6[%c0_20, %c0_21] : memref<16x128xf32, #tpu.memory_space<vmem>>, vector<16x128xf32>
    %51 = arith.mulf %49, %43 : vector<16x128xf32>
    %52 = arith.addf %50, %51 : vector<16x128xf32>
    %c0_22 = arith.constant 0 : index
    %c0_23 = arith.constant 0 : index
    %53 = vector.load %arg6[%c0_22, %c0_23] : memref<16x128xf32, #tpu.memory_space<vmem>>, vector<16x128xf32>
    tpu.vector_store %arg6[%c0_22, %c0_23], %52 {strides = array<i32>} : memref<16x128xf32, #tpu.memory_space<vmem>>, vector<16x128xf32>,
    %c0_i32_24 = arith.constant 0 : i32
    %54 = arith.cmpi eq, %arg1, %c0_i32_24 : i32
    %55 = arith.extui %54 : i1 to i32
    %c0_i32_25 = arith.constant 0 : i32
    %56 = arith.cmpi ne, %55, %c0_i32_25 : i32
    scf.if %56 {
      %c0_26 = arith.constant 0 : index
      %c0_27 = arith.constant 0 : index
      %57 = vector.load %arg6[%c0_26, %c0_27] : memref<16x128xf32, #tpu.memory_space<vmem>>, vector<16x128xf32>
      %58 = vector.shape_cast %57 : vector<16x128xf32> to vector<1x16x128xf32>
      %cst_28 = arith.constant dense<0.000000e+00> : vector<1xf32>
      %59 = vector.multi_reduction <add>, %58, %cst_28 [1, 2] : vector<1x16x128xf32> to vector<1xf32>
      %60 = vector.shape_cast %59 : vector<1xf32> to vector<1x1x1xf32>
      %61 = vector.extract %60[0, 0, 0] : f32 from vector<1x1x1xf32>
      %cst_29 = arith.constant 1.000000e+00 : f32
      %62 = arith.mulf %cst_29, %61 : f32
      %63 = vector.broadcast %62 : f32 to vector<1x1x1xf32>
      %c0_30 = arith.constant 0 : index
      %c0_31 = arith.constant 0 : index
      %c0_32 = arith.constant 0 : index
      %64 = vector.load %arg5[%c0_30, %c0_31, %c0_32] : memref<1x1x1xf32, #tpu.memory_space<vmem>>, vector<1x1x1xf32>
      tpu.vector_store %arg5[%c0_30, %c0_31, %c0_32], %63 {strides = array<i32>} : memref<1x1x1xf32, #tpu.memory_space<vmem>>, vector<1x1x1xf32>,
    } else {
    }
    return
  }
  func.func @transform_0(%arg0: i32, %arg1: i32) -> i32 {
    %c0_i32 = arith.constant 0 : i32
    %c0_i32_0 = arith.constant 0 : i32
    return %c0_i32 : i32
  }
  func.func @transform_1(%arg0: i32, %arg1: i32) -> (i32, i32, i32) {
    %c1_i32 = arith.constant 1 : i32
    %0 = arith.muli %arg0, %c1_i32 : i32
    %1 = arith.addi %0, %arg1 : i32
    %c0_i32 = arith.constant 0 : i32
    %c0_i32_0 = arith.constant 0 : i32
    %c0_i32_1 = arith.constant 0 : i32
    return %c0_i32, %1, %c0_i32_0 : i32, i32, i32
  }
  func.func @transform_2(%arg0: i32, %arg1: i32) -> (i32, i32, i32) {
    %c1_i32 = arith.constant 1 : i32
    %0 = arith.muli %arg0, %c1_i32 : i32
    %1 = arith.addi %0, %arg1 : i32
    %c0_i32 = arith.constant 0 : i32
    %c0_i32_0 = arith.constant 0 : i32
    %c0_i32_1 = arith.constant 0 : i32
    return %c0_i32, %1, %c0_i32_0 : i32, i32, i32
  }
  func.func @transform_3(%arg0: i32, %arg1: i32) -> (i32, i32, i32) {
    %c0_i32 = arith.constant 0 : i32
    %c0_i32_0 = arith.constant 0 : i32
    %c0_i32_1 = arith.constant 0 : i32
    return %arg0, %c0_i32, %c0_i32_0 : i32, i32, i32
  }
}

</mosaic_0001>

<llo_original>
// kernel: tpu_custom_call.1
$region0: #{tpu_custom_call.1}
  #allocation0 [shape = 'u32[]', space=smem, size = 0x4, offset = 0x4, fixed_abs, tag = 'smem constant byte address 0x4 - core index']
  #allocation1 [shape = 'u32[144,128]{1,0:T(1,128)}', space=vmem, size = 0x12000, scoped, tag = 'internal scratch']
  #allocation2 [shape = 'f32[16,128]{1,0:T(8,128)}', space=vmem, size = 0x2000, scoped, tag = 'scratch operand']
  #allocation9 [shape = 's32[]', space=sflag, size = 0x4, offset = 0, fixed_abs, tag = 'sflag constant byte address 0x0 - dummy sync flag']
  #allocation11 [shape = 's32[]', space=sflag, size = 0x4, offset = 0, fixed_abs, tag = 'sflag constant byte address 0x0 - dummy sync flag']
  %s0 = inlined_call_operand.hbm [shape: f32[3], index: 0, kind: input, shape index: {}]
  %s1 = inlined_call_operand.hbm [shape: f32[3,32,128], index: 1, kind: input, shape index: {}]
  %s2 = inlined_call_operand.hbm [shape: f32[3,32,128], index: 2, kind: input, shape index: {}]
  %s3 = inlined_call_operand.vmem [shape: f32[2,1,1], index: 3, kind: output, shape index: {}]
  %s4 = sld [smem:[#allocation0]]
  $region65: #{tpu_custom_call.1} parent=0
    _
  %s6 = ssub.s32 1, %s4
  %s7 = scalar_select 0, %s6, %s4
  $region1: #{tpu_custom_call.1} parent=0
    #allocation3 [shape = 'u8[512]{0}', space=smem, size = 0x200, scoped, tag = 'input window, operand 0, single buffered']
    #allocation4 [shape = 's32[2]{0}', space=sflag, size = 0x8, scoped, tag = 'scoped memory for tpu_custom_call.1']
    #allocation5 [shape = 's32[2]{0}', space=sflag, size = 0x8, scoped, tag = 'scoped memory for tpu_custom_call.1']
    #allocation6 [shape = 'u8[49152]{0}', space=vmem, size = 0xc000, scoped, tag = 'input window, operand 1']
    #allocation7 [shape = 'u8[49152]{0}', space=vmem, size = 0xc000, scoped, tag = 'input window, operand 2']
    #allocation8 [shape = 's32[2]{0}', space=sflag, size = 0x8, scoped, tag = 'scoped memory for tpu_custom_call.1']
    %8 = vsyncpa [#allocation5], 0
    %9 = vsyncpa [#allocation4], 0
    %s10 = scalar_lea.sflag [#allocation4], 1
    %11 = vsyncpa %s10, 0
    %12 = vsyncpa [#allocation8], 0
    %s13 = scalar_lea.sflag [#allocation8], 1
    %14 = vsyncpa %s13, 0
    loop: start=0, step=1, limit=4
    $region2: #{tpu_custom_call.1} parent=1 // loop_pre_header
      _
    $region3: #{tpu_custom_call.1} parent=1 // loop_header
      %s16 = sphi 0, %s20
      %p17 = scmp.ge.s32.totalorder %s16, 4
      %s23 = sphi 0, %s35
      %s24 = sphi 0, %s31
      %s25 = sphi 0, %s23
      %s26 = sphi 0, %s24
      %s27 = sphi 0, %s25
      %s28 = sphi 0, %s26
      %s36 = sphi 0, %s36
      %s38 = sphi 0, %s36
      %s39 = sphi 0, %s38
      %s53 = sphi 0, %s39
      %s61 = sphi 0, %s63
      %s64 = sphi 0, %s61
      %s65 = sphi 0, %s64
      %s81 = sphi 0, %s65
      %s89 = sphi 0, %s91
      %s92 = sphi 0, %s89
      %s93 = sphi 0, %s92
      %s109 = sphi 0, %s93
      %s115 = sphi 0, %s117
      %s118 = sphi 0, %s115
      %s119 = sphi 0, %s118
      %s135 = sphi 0, %s119
    $region4: #{tpu_custom_call.1} parent=1 // loop_header_branch
      %19 = sbr.rel (%p17) target = $region8
    $region5: #{tpu_custom_call.1} parent=1 // loop_body
      %s21 = ssub.s32 %s16, 1
      %s22 = ssub.s32 %s16, 2
      %s29 = sadd.s32 1, %s24
      %p30 = scmp.ge.s32.totalorder %s29, 1
      %s31 = scalar_select %p30, 0, %s29
      %s32 = sadd.s32 1, %s23
      %s33 = scalar_select %p30, %s32, %s23
      %p34 = scmp.ge.s32.totalorder %s33, 2
      %s35 = scalar_select %p34, 0, %s33
      %s37 = sadd.s32 %s36, 1
      %p40 = scmp.eq.s32.totalorder %s16, 1
      %p41 = scmp.ne.s32.totalorder %s36, %s38
      %p42 = scmp.eq.s32.totalorder %s16, 0
      %p43 = por %p41, %p42
      %p44 = scmp.ne.s32.totalorder %s36, %s38
      %p45 = scmp.eq.s32.totalorder %s21, 1
      %p46 = por %p44, %p45
      %p47 = scmp.ne.s32.totalorder %s38, %s39
      %p48 = scmp.eq.s32.totalorder %s21, 0
      %p49 = por %p47, %p48
      %p50 = scmp.ne.s32.totalorder %s38, %s39
      %p51 = scmp.eq.s32.totalorder %s22, 1
      %p52 = por %p50, %p51
      %p54 = scmp.ne.s32.totalorder %s39, %s53
      %p55 = scmp.eq.s32.totalorder %s22, 0
      %p56 = por %p54, %p55
      %s57 = sadd.s32 %s23, %s24
      %s58 = sadd.s32 %s35, %s31
      %s59 = ssub.s32 %s57, %s58
      %p60 = scmp.eq.s32.totalorder %s59, 0
      %s62 = sadd.s32 %s61, 1
      %s63 = scalar_select %p60, %s61, %s62
      %p66 = pneg %p60
      %p67 = scmp.eq.s32.totalorder %s16, 1
      %p68 = por %p66, %p67
      %p69 = scmp.ne.s32.totalorder %s61, %s64
      %p70 = scmp.eq.s32.totalorder %s16, 0
      %p71 = por %p69, %p70
      %p72 = scmp.ne.s32.totalorder %s61, %s64
      %p73 = scmp.eq.s32.totalorder %s21, 1
      %p74 = por %p72, %p73
      %p75 = scmp.ne.s32.totalorder %s64, %s65
      %p76 = scmp.eq.s32.totalorder %s21, 0
      %p77 = por %p75, %p76
      %p78 = scmp.ne.s32.totalorder %s64, %s65
      %p79 = scmp.eq.s32.totalorder %s22, 1
      %p80 = por %p78, %p79
      %p82 = scmp.ne.s32.totalorder %s65, %s81
      %p83 = scmp.eq.s32.totalorder %s22, 0
      %p84 = por %p82, %p83
      %s85 = sadd.s32 %s23, %s24
      %s86 = sadd.s32 %s35, %s31
      %s87 = ssub.s32 %s85, %s86
      %p88 = scmp.eq.s32.totalorder %s87, 0
      %s90 = sadd.s32 %s89, 1
      %s91 = scalar_select %p88, %s89, %s90
      %p94 = pneg %p88
      %p95 = scmp.eq.s32.totalorder %s16, 1
      %p96 = por %p94, %p95
      %p97 = scmp.ne.s32.totalorder %s89, %s92
      %p98 = scmp.eq.s32.totalorder %s16, 0
      %p99 = por %p97, %p98
      %p100 = scmp.ne.s32.totalorder %s89, %s92
      %p101 = scmp.eq.s32.totalorder %s21, 1
      %p102 = por %p100, %p101
      %p103 = scmp.ne.s32.totalorder %s92, %s93
      %p104 = scmp.eq.s32.totalorder %s21, 0
      %p105 = por %p103, %p104
      %p106 = scmp.ne.s32.totalorder %s92, %s93
      %p107 = scmp.eq.s32.totalorder %s22, 1
      %p108 = por %p106, %p107
      %p110 = scmp.ne.s32.totalorder %s93, %s109
      %p111 = scmp.eq.s32.totalorder %s22, 0
      %p112 = por %p110, %p111
      %s113 = ssub.s32 %s23, %s35
      %p114 = scmp.eq.s32.totalorder %s113, 0
      %s116 = sadd.s32 %s115, 1
      %s117 = scalar_select %p114, %s115, %s116
      %p120 = pneg %p114
      %p121 = scmp.eq.s32.totalorder %s16, 1
      %p122 = por %p120, %p121
      %p123 = scmp.ne.s32.totalorder %s115, %s118
      %p124 = scmp.eq.s32.totalorder %s16, 0
      %p125 = por %p123, %p124
      %p126 = scmp.ne.s32.totalorder %s115, %s118
      %p127 = scmp.eq.s32.totalorder %s21, 1
      %p128 = por %p126, %p127
      %p129 = scmp.ne.s32.totalorder %s118, %s119
      %p130 = scmp.eq.s32.totalorder %s21, 0
      %p131 = por %p129, %p130
      %p132 = scmp.ne.s32.totalorder %s118, %s119
      %p133 = scmp.eq.s32.totalorder %s22, 1
      %p134 = por %p132, %p133
      %p136 = scmp.ne.s32.totalorder %s119, %s135
      %p137 = scmp.eq.s32.totalorder %s22, 0
      %p138 = por %p136, %p137
      %p139 = scmp.le.s32.totalorder 1, %s16
      %p140 = scmp.lt.s32.totalorder %s16, 3
      %p141 = pnand %p139, %p140
      %p142 = pneg %p141
      // Predicated region
      $region9: #{tpu_custom_call.1} parent=5 // pred_check
        _
      $region10: #{tpu_custom_call.1} parent=5 // pred_check_branch
        %144 = sbr.rel (%p141) target = $region12
      $region11: #{tpu_custom_call.1} parent=5 // pred_region
        %s145 = ssub.s32 %s16, 1
        // Predicated region
        $region13: #{tpu_custom_call.1} parent=11 // pred_check
          %p146 = pneg %p49
        $region14: #{tpu_custom_call.1} parent=11 // pred_check_branch
          %148 = sbr.rel (%p146) target = $region16
        $region15: #{tpu_custom_call.1} parent=11 // pred_region
          %s150 = ssub.s32 16, 16
          %151 = vsyncadd [#allocation5], %s150
          %154 = dma.hbm_to_smem %s0, 16, [#allocation3], [#allocation5]
        $region16: #{tpu_custom_call.1} parent=11 // pred_fallthru
          _
      $region12: #{tpu_custom_call.1} parent=5 // pred_fallthru
        _
      %p155 = scmp.lt.s32.totalorder %s16, 2
      // Predicated region
      $region17: #{tpu_custom_call.1} parent=5 // pred_check
        %p156 = pneg %p155
      $region18: #{tpu_custom_call.1} parent=5 // pred_check_branch
        %158 = sbr.rel (%p156) target = $region20
      $region19: #{tpu_custom_call.1} parent=5 // pred_region
        // Predicated region
        $region21: #{tpu_custom_call.1} parent=19 // pred_check
          %p159 = pneg %p71
        $region22: #{tpu_custom_call.1} parent=19 // pred_check_branch
          %161 = sbr.rel (%p159) target = $region24
        $region23: #{tpu_custom_call.1} parent=19 // pred_region
          #allocation10 [shape = 'u32[6]{0}', space=smem, size = 0x18, scoped, tag = 'DMA stride descriptor']
          %s162 = sand.u32 %s61, 1
          %s163 = scalar_lea.sflag [#allocation4], %s162
          %s164 = sand.u32 %s61, 1
          %s165 = smul.addr %s164, 48
          %s166 = scalar_lea.vmem [#allocation6], %s165
          %s167 = sadd.s32 %s23, %s24
          %s168 = smul.u32 2, %s167
          %s170 = ssub.s32 768, 768
          %171 = vsyncadd %s163, %s170
          %s172 = smul.addr %s168, 128
          %s173 = scalar_lea.hbm %s1, %s172
          %s175 = sshll.u32 1, 14
          %s176 = sxor.u32 4294967295, %s175
          %s178 = sld [smem:[#allocation0]]
          %s179 = sadd.s32 2, %s178
          %s181 = sshll.u32 7, 26
          %s182 = sxor.u32 4294967295, %s181
          %s183 = sand.u32 0, %s182
          %s184 = sshll.u32 %s179, 26
          %s185 = sor.u32 %s183, %s184
          %s186 = sshll.u32 %s166, 4
          %s187 = int_to_ptr.vmem [resolvable:$true] %s186
          %193 = sst [smem:[#allocation10]] 512
          %s194 = scalar_lea.smem [#allocation10], 1
          %195 = sst [smem:[%s194]] 256
          %s196 = scalar_lea.smem [#allocation10], 2
          %197 = sst [smem:[%s196]] 2
          %s198 = scalar_lea.smem [#allocation10], 3
          %199 = sst [smem:[%s198]] 128
          %s200 = scalar_lea.smem [#allocation10], 4
          %201 = sst [smem:[%s200]] 128
          %s202 = scalar_lea.smem [#allocation10], 5
          %203 = sst [smem:[%s202]] 8
          %205 = dma.general %s173, 768, %s187, %s163, [#allocation9], [#allocation10], %s185, 0
        $region24: #{tpu_custom_call.1} parent=19 // pred_fallthru
          _
        // Predicated region
        $region25: #{tpu_custom_call.1} parent=19 // pred_check
          %p206 = pneg %p99
        $region26: #{tpu_custom_call.1} parent=19 // pred_check_branch
          %208 = sbr.rel (%p206) target = $region28
        $region27: #{tpu_custom_call.1} parent=19 // pred_region
          #allocation12 [shape = 'u32[6]{0}', space=smem, size = 0x18, scoped, tag = 'DMA stride descriptor']
          %s209 = sand.u32 %s89, 1
          %s210 = scalar_lea.sflag [#allocation8], %s209
          %s211 = sand.u32 %s89, 1
          %s212 = smul.addr %s211, 48
          %s213 = scalar_lea.vmem [#allocation7], %s212
          %s214 = sadd.s32 %s23, %s24
          %s215 = smul.u32 2, %s214
          %s217 = ssub.s32 768, 768
          %218 = vsyncadd %s210, %s217
          %s219 = smul.addr %s215, 128
          %s220 = scalar_lea.hbm %s2, %s219
          %s222 = sshll.u32 1, 14
          %s223 = sxor.u32 4294967295, %s222
          %s225 = sld [smem:[#allocation0]]
          %s226 = sadd.s32 2, %s225
          %s228 = sshll.u32 7, 26
          %s229 = sxor.u32 4294967295, %s228
          %s230 = sand.u32 0, %s229
          %s231 = sshll.u32 %s226, 26
          %s232 = sor.u32 %s230, %s231
          %s233 = sshll.u32 %s213, 4
          %s234 = int_to_ptr.vmem [resolvable:$true] %s233
          %240 = sst [smem:[#allocation12]] 512
          %s241 = scalar_lea.smem [#allocation12], 1
          %242 = sst [smem:[%s241]] 256
          %s243 = scalar_lea.smem [#allocation12], 2
          %244 = sst [smem:[%s243]] 2
          %s245 = scalar_lea.smem [#allocation12], 3
          %246 = sst [smem:[%s245]] 128
          %s247 = scalar_lea.smem [#allocation12], 4
          %248 = sst [smem:[%s247]] 128
          %s249 = scalar_lea.smem [#allocation12], 5
          %250 = sst [smem:[%s249]] 8
          %252 = dma.general %s220, 768, %s234, %s210, [#allocation11], [#allocation12], %s232, 0
        $region28: #{tpu_custom_call.1} parent=19 // pred_fallthru
          _
      $region20: #{tpu_custom_call.1} parent=5 // pred_fallthru
        _
      %p253 = scmp.le.s32.totalorder 1, %s16
      %p254 = scmp.lt.s32.totalorder %s16, 3
      %p255 = pnand %p253, %p254
      %p256 = pneg %p255
      // Predicated region
      $region29: #{tpu_custom_call.1} parent=5 // pred_check
        _
      $region30: #{tpu_custom_call.1} parent=5 // pred_check_branch
        %258 = sbr.rel (%p255) target = $region32
      $region31: #{tpu_custom_call.1} parent=5 // pred_region
        %s259 = ssub.s32 %s16, 1
        // Predicated region
        $region33: #{tpu_custom_call.1} parent=31 // pred_check
          %p260 = pneg %p49
        $region34: #{tpu_custom_call.1} parent=31 // pred_check_branch
          %262 = sbr.rel (%p260) target = $region36
        $region35: #{tpu_custom_call.1} parent=31 // pred_region
          %263 = dma.done [#allocation5], 16
        $region36: #{tpu_custom_call.1} parent=31 // pred_fallthru
          _
        %s264 = sand.u32 %s64, 1
        %s265 = scalar_lea.sflag [#allocation4], %s264
        %s266 = sand.u32 %s64, 1
        %s267 = smul.addr %s266, 48
        %s268 = scalar_lea.vmem [#allocation6], %s267
        // Predicated region
        $region37: #{tpu_custom_call.1} parent=31 // pred_check
          %p269 = pneg %p77
        $region38: #{tpu_custom_call.1} parent=31 // pred_check_branch
          %271 = sbr.rel (%p269) target = $region40
        $region39: #{tpu_custom_call.1} parent=31 // pred_region
          %272 = dma.done %s265, 768
        $region40: #{tpu_custom_call.1} parent=31 // pred_fallthru
          _
        %s273 = sand.u32 %s92, 1
        %s274 = scalar_lea.sflag [#allocation8], %s273
        %s275 = sand.u32 %s92, 1
        %s276 = smul.addr %s275, 48
        %s277 = scalar_lea.vmem [#allocation7], %s276
        // Predicated region
        $region41: #{tpu_custom_call.1} parent=31 // pred_check
          %p278 = pneg %p105
        $region42: #{tpu_custom_call.1} parent=31 // pred_check_branch
          %280 = sbr.rel (%p278) target = $region44
        $region43: #{tpu_custom_call.1} parent=31 // pred_region
          %281 = dma.done %s274, 768
        $region44: #{tpu_custom_call.1} parent=31 // pred_fallthru
          _
        %282 = sfence
        %p283 = pneg %p49
        %p284 = pneg %p46
        %s285 = sand.u32 %s64, 1
        %s286 = scalar_lea.sflag [#allocation4], %s285
        %s287 = sand.u32 %s64, 1
        %s288 = smul.addr %s287, 48
        %s289 = scalar_lea.vmem [#allocation6], %s288
        %p290 = pneg %p77
        %p291 = pneg %p74
        %s292 = sand.u32 %s92, 1
        %s293 = scalar_lea.sflag [#allocation8], %s292
        %s294 = sand.u32 %s92, 1
        %s295 = smul.addr %s294, 48
        %s296 = scalar_lea.vmem [#allocation7], %s295
        %p297 = pneg %p105
        %p298 = pneg %p102
        %p299 = pneg %p131
        %p300 = pneg %p128
        %p301 = scmp.lt.s32.totalorder %s25, 1
        %s302 = scalar_select %p301, %s25, 1
        %s303 = scalar_lea.vmem %s3, %s302
        %s304 = sadd.s32 %s25, %s26
        %s305 = smul.u32 2, %s304
        %s306 = sadd.s32 %s25, %s26
        %s307 = smul.u32 2, %s306
        %p308 = scmp.lt.s32.totalorder %s25, 1
        %s309 = scalar_select %p308, %s25, 1
        %s310 = scalar_lea.vmem %s3, %s309
        %p311 = scmp.eq.s32.totalorder %s26, 0
        // Predicated region
        $region45: #{tpu_custom_call.1} parent=31 // pred_check
          %p312 = pneg %p311
        $region46: #{tpu_custom_call.1} parent=31 // pred_check_branch
          %314 = sbr.rel (%p312) target = $region48
        $region47: #{tpu_custom_call.1} parent=31 // pred_region
          %315 = vst [vmem:[#allocation2] sm:$0xff] 0.0
          %316 = vst [vmem:[#allocation2 + $0x8] sm:$0xff] 0.0
        $region48: #{tpu_custom_call.1} parent=31 // pred_fallthru
          _
        %v317 = vld [vmem:[%s268] sm:$0xff]
        %v318 = vld [vmem:[%s268 + $0x8] sm:$0xff]
        %s319 = scalar_lea.vmem %s268, 16 [#allocation6]
        %v320 = vld [vmem:[%s319] sm:$0xff]
        %v321 = vld [vmem:[%s319 + $0x8] sm:$0xff]
        %s322 = scalar_lea.vmem %s268, 32 [#allocation6]
        %v323 = vld [vmem:[%s322] sm:$0xff]
        %v324 = vld [vmem:[%s322 + $0x8] sm:$0xff]
        %v325 = vmax.f32 %v317, %v320
        %v326 = vmax.f32 %v318, %v321
        %v327 = vmax.f32 %v325, %v323
        %v328 = vmax.f32 %v326, %v324
        %v329 = vsub.f32 %v317, %v327
        %v330 = vsub.f32 %v318, %v328
        %v331 = vmul.f32 %v329, 1.442695
        %v332 = vpow.pop %v331
        %v333 = vmul.f32 %v330, 1.442695
        %v334 = vpow.pop %v333
        %v335 = vsub.f32 %v320, %v327
        %v336 = vsub.f32 %v321, %v328
        %v337 = vmul.f32 %v335, 1.442695
        %v338 = vpow.pop %v337
        %v339 = vmul.f32 %v336, 1.442695
        %v340 = vpow.pop %v339
        %v341 = vsub.f32 %v323, %v327
        %v342 = vsub.f32 %v324, %v328
        %v343 = vmul.f32 %v341, 1.442695
        %v344 = vpow.pop %v343
        %v345 = vmul.f32 %v342, 1.442695
        %v346 = vpow.pop %v345
        %v347 = vadd.f32 %v332, %v338
        %v348 = vadd.f32 %v334, %v340
        %v349 = vadd.f32 %v347, %v344
        %v350 = vadd.f32 %v348, %v346
        %v351 = vlog2.pop %v349
        %v352 = vmul.f32 %v351, 0.6931472
        %v353 = vlog2.pop %v350
        %v354 = vmul.f32 %v353, 0.6931472
        %v355 = vadd.f32 %v352, %v327
        %v356 = vadd.f32 %v354, %v328
        %s357 = sld [smem:[#allocation3]]
        %v358 = vld [vmem:[%s277] sm:$0xff]
        %v359 = vld [vmem:[%s277 + $0x8] sm:$0xff]
        %v360 = vstv %s357
        %v361 = vmul.f32 %v360, %v358
        %v362 = vmul.f32 %v360, %v359
        %v363 = vsub.f32 %v355, %v317
        %v364 = vsub.f32 %v356, %v318
        %v365 = vmul.f32 %v361, %v363
        %v366 = vmul.f32 %v362, %v364
        %s367 = sld [smem:[#allocation3 + $0x1]]
        %s368 = scalar_lea.vmem %s277, 16 [#allocation7]
        %v369 = vld [vmem:[%s368] sm:$0xff]
        %v370 = vld [vmem:[%s368 + $0x8] sm:$0xff]
        %v371 = vstv %s367
        %v372 = vmul.f32 %v371, %v369
        %v373 = vmul.f32 %v371, %v370
        %v374 = vsub.f32 %v355, %v320
        %v375 = vsub.f32 %v356, %v321
        %v376 = vmul.f32 %v372, %v374
        %v377 = vmul.f32 %v373, %v375
        %v378 = vadd.f32 %v365, %v376
        %v379 = vadd.f32 %v366, %v377
        %s380 = sld [smem:[#allocation3 + $0x2]]
        %s381 = scalar_lea.vmem %s277, 32 [#allocation7]
        %v382 = vld [vmem:[%s381] sm:$0xff]
        %v383 = vld [vmem:[%s381 + $0x8] sm:$0xff]
        %v384 = vstv %s380
        %v385 = vmul.f32 %v384, %v382
        %v386 = vmul.f32 %v384, %v383
        %v387 = vsub.f32 %v355, %v323
        %v388 = vsub.f32 %v356, %v324
        %v389 = vmul.f32 %v385, %v387
        %v390 = vmul.f32 %v386, %v388
        %v391 = vadd.f32 %v378, %v389
        %v392 = vadd.f32 %v379, %v390
        %v393 = vsub.f32 0.0, %v391
        %v394 = vsub.f32 0.0, %v392
        %v395 = vmul.f32 %v393, 1.442695
        %v396 = vpow.pop %v395
        %v397 = vmul.f32 %v394, 1.442695
        %v398 = vpow.pop %v397
        %v399 = vsub.f32 1.0, %v396
        %v400 = vsub.f32 1.0, %v398
        %v401 = vmul.f32 %v399, %v399
        %v402 = vmul.f32 %v400, %v400
        %v403 = vld [vmem:[#allocation2] sm:$0xff]
        %v404 = vld [vmem:[#allocation2 + $0x8] sm:$0xff]
        %v405 = vmul.f32 %v401, %v391
        %v406 = vmul.f32 %v402, %v392
        %v407 = vadd.f32 %v403, %v405
        %v408 = vadd.f32 %v404, %v406
        %409 = vst [vmem:[#allocation2] sm:$0xff] %v407
        %410 = vst [vmem:[#allocation2 + $0x8] sm:$0xff] %v408
        // Predicated region
        $region49: #{tpu_custom_call.1} parent=31 // pred_check
          %p411 = pneg %p311
        $region50: #{tpu_custom_call.1} parent=31 // pred_check_branch
          %413 = sbr.rel (%p411) target = $region52
        $region51: #{tpu_custom_call.1} parent=31 // pred_region
          %v414 = vld [vmem:[#allocation2] sm:$0xff]
          %v415 = vld [vmem:[#allocation2 + $0x8] sm:$0xff]
          %v416 = vadd.f32 %v414, %v415
          %417 = vadd.xlane.f32.xlu0 %v416
          %v418 = vpop.xlane.xlu0 %417
          %v419 = vrot.slane %v418, 4
          %v420 = vadd.f32 %v418, %v419
          %v421 = vrot.slane %v420, 2
          %v422 = vadd.f32 %v420, %v421
          %v423 = vrot.slane %v422, 1
          %v424 = vadd.f32 %v422, %v423
          %s425 = vtos %v424
          %v426 = vstv %s425
          %vm427 = vcmask 0
          %428 = vst.msk [vmem:[%s310] sm:$0x1] %vm427, %v426
        $region52: #{tpu_custom_call.1} parent=31 // pred_fallthru
          _
        %p429 = scmp.lt.s32.totalorder %s25, 1
        %s430 = scalar_select %p429, %s25, 1
        %s431 = scalar_lea.vmem %s3, %s430
        // Predicated region
        $region53: #{tpu_custom_call.1} parent=31 // pred_check
          %p432 = pneg %p128
        $region54: #{tpu_custom_call.1} parent=31 // pred_check_branch
          %434 = sbr.rel (%p432) target = $region56
        $region55: #{tpu_custom_call.1} parent=31 // pred_region
          _
        $region56: #{tpu_custom_call.1} parent=31 // pred_fallthru
          _
      $region32: #{tpu_custom_call.1} parent=5 // pred_fallthru
        _
      %p435 = scmp.le.s32.totalorder 2, %s16
      // Predicated region
      $region57: #{tpu_custom_call.1} parent=5 // pred_check
        %p436 = pneg %p435
      $region58: #{tpu_custom_call.1} parent=5 // pred_check_branch
        %438 = sbr.rel (%p436) target = $region60
      $region59: #{tpu_custom_call.1} parent=5 // pred_region
        %s439 = ssub.s32 %s16, 2
        // Predicated region
        $region61: #{tpu_custom_call.1} parent=59 // pred_check
          %p440 = pneg %p134
        $region62: #{tpu_custom_call.1} parent=59 // pred_check_branch
          %442 = sbr.rel (%p440) target = $region64
        $region63: #{tpu_custom_call.1} parent=59 // pred_region
          %p443 = scmp.lt.s32.totalorder %s27, 1
          %s444 = scalar_select %p443, %s27, 1
          %s445 = scalar_lea.vmem %s3, %s444
        $region64: #{tpu_custom_call.1} parent=59 // pred_fallthru
          _
      $region60: #{tpu_custom_call.1} parent=5 // pred_fallthru
        _
    $region6: #{tpu_custom_call.1} parent=1 // loop_footer
      %s20 = sadd.s32 1, %s16
    $region7: #{tpu_custom_call.1} parent=1 // loop_footer_branch
      %15 = sbr.rel target = $region3
    $region8: #{tpu_custom_call.1} parent=1 // loop_exit
      _
    %446 = vsyncpa [#allocation4], 1
    %s447 = scalar_lea.sflag [#allocation4], 1
    %448 = vsyncpa %s447, 1
    %449 = vsyncpa [#allocation8], 1
    %s450 = scalar_lea.sflag [#allocation8], 1
    %451 = vsyncpa %s450, 1
    %452 = vsyncpa [#allocation5], 1
    %s453 = scalar_lea.sflag [#allocation5], 1
    %454 = vsyncpa %s453, 1

</llo_original>
